<compile_context>
chip_gen: v6e
topology: v6e:2x2x1
jax: 0.10.0
libtpu: 0.0.40
codegen_flags: <defaults>
</compile_context>

<pallas_src>
import functools
import math

import jax
import jax.numpy as jnp
from jax.experimental import pallas as pl
from jax.experimental.pallas import tpu as pltpu

_MiB = 1024 * 1024


def _round_up(x, m):
    return ((x + m - 1) // m) * m


def _vmem_capacity_bytes():
    """Physical VMEM per core; conservative (v7x) default if query fails."""
    try:
        return int(pltpu.get_tpu_info().vmem_capacity_bytes)
    except Exception:
        return 64 * _MiB


# -----------------------------------------------------------------------------
# Path 1: fused whole-MLP kernel (small/medium layers — all weights resident
# in VMEM, intermediate activations never touch HBM).
# -----------------------------------------------------------------------------
def _fused_mlp_kernel(x_ref, *refs, n_layers):
    # refs = (w1, b1, w2, b2, ..., wn, bn, o_ref); all padded to 128 lanes.
    o_ref = refs[-1]
    act = x_ref[...]
    for i in range(n_layers):
        w = refs[2 * i][...]
        b = refs[2 * i + 1][...]
        act = jnp.dot(act.astype(w.dtype), w,
                      preferred_element_type=jnp.float32) + b
        if i < n_layers - 1:
            act = jnp.maximum(act, 0.0)
    o_ref[...] = act.astype(o_ref.dtype)


def fused_mlp_forward(x_pad, padded_params, tb, vmem_limit):
    """Run all layers inside a single pallas_call.

    x_pad:         (Bpad, Din_pad) float32, Bpad % tb == 0, Din_pad % 128 == 0
    padded_params: sequence of (W^T padded (Din_pad_i, Dout_pad_i),
                                bias (1, Dout_pad_i))
    tb:            batch tile (multiple of 8); batch axis is the only grid axis
                   and is marked "parallel" (shards across TCs on v7x).
    """
    Bpad, Din_pad = x_pad.shape
    n_layers = len(padded_params)
    Dout_pad = padded_params[-1][0].shape[1]

    inputs = [x_pad]
    in_specs = [pl.BlockSpec((tb, Din_pad), lambda i: (i, 0))]
    for w_t, b2 in padded_params:
        inputs.append(w_t)
        inputs.append(b2)
        # Constant block index -> resident across the (parallel) batch-tile
        # axis.  Single-buffer them: double-buffering a never-changing block
        # only doubles its VMEM footprint.
        in_specs.append(pl.BlockSpec(w_t.shape, lambda i: (0, 0),
                                     pipeline_mode=pl.Buffered(1)))
        in_specs.append(pl.BlockSpec(b2.shape, lambda i: (0, 0),
                                     pipeline_mode=pl.Buffered(1)))

    flops = 2 * Bpad * sum(w.shape[0] * w.shape[1] for w, _ in padded_params)
    bytes_accessed = (
        4 * x_pad.size
        + 4 * Bpad * Dout_pad
        + sum(w.size * w.dtype.itemsize + 4 * b.size for w, b in padded_params)
    )

    kernel = functools.partial(_fused_mlp_kernel, n_layers=n_layers)
    return pl.pallas_call(
        kernel,
        out_shape=jax.ShapeDtypeStruct((Bpad, Dout_pad), jnp.float32),
        grid_spec=pltpu.PrefetchScalarGridSpec(
            num_scalar_prefetch=0,
            grid=(Bpad // tb,),
            in_specs=in_specs,
            out_specs=pl.BlockSpec((tb, Dout_pad), lambda i: (i, 0)),
        ),
        compiler_params=pltpu.CompilerParams(
            dimension_semantics=("parallel",),
            vmem_limit_bytes=vmem_limit,
        ),
        cost_estimate=pl.CostEstimate(
            flops=flops, transcendentals=0, bytes_accessed=bytes_accessed
        ),
    )(*inputs)


# -----------------------------------------------------------------------------
# Path 2: per-layer tiled, pipelined matmul (layers too large for the fused
# path).  Bias + ReLU are gated onto the last K step via pl.when.
# TODO(synk): fuse this path too (resident (tb x D) activation + weight
# streaming via pltpu.emit_pipeline) to remove per-layer HBM roundtrips.
# -----------------------------------------------------------------------------
def _tiled_linear_kernel(x_ref, w_ref, b_ref, o_ref, acc_ref, *, apply_relu):
    @pl.when(pl.program_id(2) == 0)
    def _():
        acc_ref[...] = jnp.zeros_like(acc_ref)

    acc_ref[...] += jnp.dot(
        x_ref[...].astype(w_ref.dtype), w_ref[...],
        preferred_element_type=jnp.float32,
    )

    @pl.when(pl.program_id(2) == pl.num_programs(2) - 1)
    def _():
        out = acc_ref[...] + b_ref[...]
        if apply_relu:
            out = jnp.maximum(out, 0.0)
        o_ref[...] = out.astype(o_ref.dtype)


def _pick_tile(dim, candidates):
    for c in candidates:
        if dim >= c and dim % c == 0:
            return c
    return dim


def _tile_candidates(big_vmem):
    if big_vmem:   # 128 MiB VMEM parts (v5e / v6e): fatter K tiles
        return ((512, 256, 128, 64, 32, 16, 8),
                (256, 128),
                (1024, 512, 256, 128))
    # v7x (64 MiB physical VMEM): keep tiles conservative
    return ((256, 128, 64, 32, 16, 8),
            (256, 128),
            (512, 256, 128))


def tiled_linear(x_pad, w_pad, b_pad, apply_relu, big_vmem, vmem_limit):
    """y = relu?(x_pad @ w_pad + b_pad) with a K-tiled MXU matmul."""
    Mpad, Kpad = x_pad.shape
    Npad = w_pad.shape[1]
    tm_c, tn_c, tk_c = _tile_candidates(big_vmem)
    tm = _pick_tile(Mpad, tm_c)
    tn = _pick_tile(Npad, tn_c)
    tk = _pick_tile(Kpad, tk_c)
    grid = (Mpad // tm, Npad // tn, Kpad // tk)

    kernel = functools.partial(_tiled_linear_kernel, apply_relu=apply_relu)
    return pl.pallas_call(
        kernel,
        out_shape=jax.ShapeDtypeStruct((Mpad, Npad), jnp.float32),
        grid_spec=pltpu.PrefetchScalarGridSpec(
            num_scalar_prefetch=0,
            grid=grid,
            in_specs=[
                pl.BlockSpec((tm, tk), lambda i, j, k: (i, k)),
                pl.BlockSpec((tk, tn), lambda i, j, k: (k, j)),
                pl.BlockSpec((1, tn), lambda i, j, k: (0, j)),
            ],
            out_specs=pl.BlockSpec((tm, tn), lambda i, j, k: (i, j)),
            scratch_shapes=[pltpu.VMEM((tm, tn), jnp.float32)],
        ),
        compiler_params=pltpu.CompilerParams(
            dimension_semantics=("parallel", "parallel", "arbitrary"),
            vmem_limit_bytes=vmem_limit,
        ),
        cost_estimate=pl.CostEstimate(
            flops=2 * Mpad * Kpad * Npad,
            transcendentals=0,
            bytes_accessed=(4 * Mpad * Kpad
                            + Kpad * Npad * w_pad.dtype.itemsize
                            + 4 * Npad + 4 * Mpad * Npad),
        ),
    )(x_pad, w_pad, b_pad)


# -----------------------------------------------------------------------------
# Jitted end-to-end forwards (pad -> kernel(s) -> slice fused into one dispatch)
# -----------------------------------------------------------------------------
def _fused_forward(x, padded_params, *, tb_cap, vmem_limit, out_dim):
    squeeze = x.ndim == 1
    if squeeze:
        x = x[None, :]
    B, Din = x.shape
    din_pad = padded_params[0][0].shape[0]
    tb = min(tb_cap, _round_up(B, 8))
    Bpad = _round_up(B, tb)
    x_pad = jnp.zeros((Bpad, din_pad), jnp.float32)
    x_pad = x_pad.at[:B, :Din].set(x.astype(jnp.float32))
    out = fused_mlp_forward(x_pad, padded_params, tb, vmem_limit)
    out = out[:B, :out_dim]
    if squeeze:
        out = out[0]
    return out


def _tiled_forward(x, padded_params, *, vmem_limit, big_vmem, out_dim):
    squeeze = x.ndim == 1
    if squeeze:
        x = x[None, :]
    B, Din = x.shape
    din_pad = padded_params[0][0].shape[0]
    Bpad = _round_up(B, 128) if B > 64 else _round_up(B, 8)
    act = jnp.zeros((Bpad, din_pad), jnp.float32)
    act = act.at[:B, :Din].set(x.astype(jnp.float32))
    n_layers = len(padded_params)
    for idx, (w_t, b2) in enumerate(padded_params):
        act = tiled_linear(act, w_t, b2, apply_relu=idx < n_layers - 1,
                           big_vmem=big_vmem, vmem_limit=vmem_limit)
    out = act[:B, :out_dim]
    if squeeze:
        out = out[0]
    return out


_fused_forward_jit = jax.jit(
    _fused_forward, static_argnames=("tb_cap", "vmem_limit", "out_dim"))
_tiled_forward_jit = jax.jit(
    _tiled_forward, static_argnames=("vmem_limit", "big_vmem", "out_dim"))


# -----------------------------------------------------------------------------
# JAX/Pallas port of the PyTorch `Net` MLP (forward pass only; `loss` is a
# training-time attribute in the original module and does not affect forward).
# -----------------------------------------------------------------------------
class NetPallas:
    def __init__(self, layer_sizes, loss="multi_class", bias=True, key=None,
                 weights_in_bf16=False):
        self.layer_sizes = list(layer_sizes)
        self.loss = loss
        self.bias = bias
        if key is None:
            key = jax.random.PRNGKey(0)

        # Generation-aware VMEM budgets.
        vmem_cap = _vmem_capacity_bytes()
        self._big_vmem = vmem_cap >= 96 * _MiB          # v5e / v6e (128 MiB)
        self._vmem_limit = 96 * _MiB if self._big_vmem else 40 * _MiB
        self._fused_budget = self._vmem_limit - 8 * _MiB
        self._tb_cap = 256   # fills 256-wide MXU (v6e/v7x) w/o blowing vregs

        w_dtype = jnp.bfloat16 if weights_in_bf16 else jnp.float32
        self.params = []          # PyTorch convention: W (out, in), b (out,)
        padded = []               # kernel-ready: W^T zero-padded, bias (1, Dout_pad)
        for i in range(1, len(self.layer_sizes)):
            fan_in = self.layer_sizes[i - 1]
            fan_out = self.layer_sizes[i]
            key, wk, bk = jax.random.split(key, 3)
            bound = 1.0 / math.sqrt(fan_in)
            w = jax.random.uniform(
                wk, (fan_out, fan_in), jnp.float32, -bound, bound)
            if bias:
                b = jax.random.uniform(
                    bk, (fan_out,), jnp.float32, -bound, bound)
            else:
                b = jnp.zeros((fan_out,), jnp.float32)
            self.params.append((w, b))

            # Cache transpose + reshape + zero-pad ONCE (not per forward).
            # Zero padding keeps the math exact: padded input columns are zero
            # and padded output columns stay zero through ReLU / later layers.
            din_pad = _round_up(fan_in, 128)
            dout_pad = _round_up(fan_out, 128)
            w_t = jnp.zeros((din_pad, dout_pad), jnp.float32)
            w_t = w_t.at[:fan_in, :fan_out].set(jnp.transpose(w))
            w_t = w_t.astype(w_dtype)
            b2 = jnp.zeros((1, dout_pad), jnp.float32)
            b2 = b2.at[0, :fan_out].set(b)
            padded.append((w_t, b2))
        self.padded_params = tuple(padded)

        self._param_bytes = sum(
            w.size * w.dtype.itemsize + 4 * b.size
            for w, b in self.padded_params)
        self._max_pad = max(max(w.shape) for w, _ in self.padded_params)
        self._fused_ok = True

    # Conservative VMEM estimate for the fused path: single-buffered params
    # (Buffered(1)), double-buffered in/out batch tiles, widest live
    # intermediate activation (may spill to VMEM), plus compiler scratch slack.
    def _fused_vmem_estimate(self, tb):
        din_pad = self.padded_params[0][0].shape[0]
        dout_pad = self.padded_params[-1][0].shape[1]
        io_bytes = 4 * tb * (2 * din_pad + 2 * dout_pad)
        live_bytes = 2 * 4 * tb * self._max_pad
        return self._param_bytes + io_bytes + live_bytes + 2 * _MiB

    def __call__(self, x):
        x = jnp.asarray(x, jnp.float32)
        B = 1 if x.ndim == 1 else x.shape[0]
        out_dim = self.layer_sizes[-1]
        tb = min(self._tb_cap, _round_up(B, 8))
        use_fused = (self._fused_ok
                     and self._fused_vmem_estimate(tb) <= self._fused_budget)
        if use_fused:
            try:
                return _fused_forward_jit(
                    x, self.padded_params, tb_cap=self._tb_cap,
                    vmem_limit=self._vmem_limit, out_dim=out_dim)
            except Exception:
                # e.g. VMEM OOM at compile for unusual shapes: fall back to the
                # tiled per-layer path from now on.
                self._fused_ok = False
        return _tiled_forward_jit(
            x, self.padded_params, vmem_limit=self._vmem_limit,
            big_vmem=self._big_vmem, out_dim=out_dim)

    forward = __call__


if __name__ == "__main__":
    # Small deterministic example: MLP 32 -> 64 -> 48 -> 10, batch of 8.
    layer_sizes = [32, 64, 48, 10]
    batch = 8

    key = jax.random.PRNGKey(0)
    key, xk = jax.random.split(key)
    x = jax.random.normal(xk, (batch, layer_sizes[0]), jnp.float32)

    net = NetPallas(layer_sizes, loss="multi_class", bias=True,
                    key=jax.random.PRNGKey(0))

    # Fused single-kernel path (auto-selected at these sizes).
    y = jax.block_until_ready(net(x))

    # Also exercise the tiled per-layer fallback path explicitly.
    y_tiled = jax.block_until_ready(
        _tiled_forward_jit(x, net.padded_params,
                           vmem_limit=net._vmem_limit,
                           big_vmem=net._big_vmem,
                           out_dim=layer_sizes[-1]))

    # Pure-JAX reference of the same forward pass.
    ref = x
    for idx, (w, b) in enumerate(net.params):
        ref = ref @ w.T + b
        if idx < len(net.params) - 1:
            ref = jnp.maximum(ref, 0.0)

    assert y.shape == (batch, layer_sizes[-1])
    assert jnp.allclose(y, ref, atol=1e-5, rtol=1e-5)
    assert jnp.allclose(y_tiled, ref, atol=1e-5, rtol=1e-5)

    print("KERNEL_OK")
</pallas_src>

<mosaic_0001>
module attributes {stable_mosaic.version = 11 : i64} {
  func.func @_fused_mlp_kernel(%arg0: i32, %arg1: memref<8x128xf32, #tpu.memory_space<vmem>>, %arg2: memref<128x128xf32, #tpu.memory_space<vmem>>, %arg3: memref<1x128xf32, #tpu.memory_space<vmem>>, %arg4: memref<128x128xf32, #tpu.memory_space<vmem>>, %arg5: memref<1x128xf32, #tpu.memory_space<vmem>>, %arg6: memref<128x128xf32, #tpu.memory_space<vmem>>, %arg7: memref<1x128xf32, #tpu.memory_space<vmem>>, %arg8: memref<8x128xf32, #tpu.memory_space<vmem>>) attributes {dimension_semantics = [#tpu.dimension_semantics<parallel>], iteration_bounds = array<i64: 1>, scalar_prefetch = 0 : i64, scratch_operands = 0 : i64, tpu.core_type = #tpu.core_type<tc>, window_params = [{transform_indices = @transform_0, window_bounds = array<i64: 8, 128>}, {pipeline_mode = #tpu.pipeline_mode<synchronous>, transform_indices = @transform_1, window_bounds = array<i64: 128, 128>}, {pipeline_mode = #tpu.pipeline_mode<synchronous>, transform_indices = @transform_2, window_bounds = array<i64: 1, 128>}, {pipeline_mode = #tpu.pipeline_mode<synchronous>, transform_indices = @transform_3, window_bounds = array<i64: 128, 128>}, {pipeline_mode = #tpu.pipeline_mode<synchronous>, transform_indices = @transform_4, window_bounds = array<i64: 1, 128>}, {pipeline_mode = #tpu.pipeline_mode<synchronous>, transform_indices = @transform_5, window_bounds = array<i64: 128, 128>}, {pipeline_mode = #tpu.pipeline_mode<synchronous>, transform_indices = @transform_6, window_bounds = array<i64: 1, 128>}, {transform_indices = @transform_7, window_bounds = array<i64: 8, 128>}]} {
    %c0 = arith.constant 0 : index
    %c0_0 = arith.constant 0 : index
    %0 = vector.load %arg1[%c0, %c0_0] : memref<8x128xf32, #tpu.memory_space<vmem>>, vector<8x128xf32>
    %c0_1 = arith.constant 0 : index
    %c0_2 = arith.constant 0 : index
    %1 = vector.load %arg2[%c0_1, %c0_2] : memref<128x128xf32, #tpu.memory_space<vmem>>, vector<128x128xf32>
    %c0_3 = arith.constant 0 : index
    %c0_4 = arith.constant 0 : index
    %2 = vector.load %arg3[%c0_3, %c0_4] : memref<1x128xf32, #tpu.memory_space<vmem>>, vector<1x128xf32>
    %cst = arith.constant dense<0.000000e+00> : vector<8x128xf32>
    %3 = tpu.matmul %0, %1, %cst {dimension_numbers = #tpu.dot_dimension_numbers<[1], [0], [0], [1], [0, 0, 1, 1], [], []>} : vector<8x128xf32>, vector<128x128xf32>, vector<8x128xf32> -> vector<8x128xf32>
    %4 = vector.broadcast %2 : vector<1x128xf32> to vector<8x128xf32>
    %5 = arith.addf %3, %4 : vector<8x128xf32>
    %cst_5 = arith.constant 0.000000e+00 : f32
    %6 = vector.broadcast %cst_5 : f32 to vector<8x128xf32>
    %7 = arith.maximumf %5, %6 : vector<8x128xf32>
    %c0_6 = arith.constant 0 : index
    %c0_7 = arith.constant 0 : index
    %8 = vector.load %arg4[%c0_6, %c0_7] : memref<128x128xf32, #tpu.memory_space<vmem>>, vector<128x128xf32>
    %c0_8 = arith.constant 0 : index
    %c0_9 = arith.constant 0 : index
    %9 = vector.load %arg5[%c0_8, %c0_9] : memref<1x128xf32, #tpu.memory_space<vmem>>, vector<1x128xf32>
    %cst_10 = arith.constant dense<0.000000e+00> : vector<8x128xf32>
    %10 = tpu.matmul %7, %8, %cst_10 {dimension_numbers = #tpu.dot_dimension_numbers<[1], [0], [0], [1], [0, 0, 1, 1], [], []>} : vector<8x128xf32>, vector<128x128xf32>, vector<8x128xf32> -> vector<8x128xf32>
    %11 = vector.broadcast %9 : vector<1x128xf32> to vector<8x128xf32>
    %12 = arith.addf %10, %11 : vector<8x128xf32>
    %cst_11 = arith.constant 0.000000e+00 : f32
    %13 = vector.broadcast %cst_11 : f32 to vector<8x128xf32>
    %14 = arith.maximumf %12, %13 : vector<8x128xf32>
    %c0_12 = arith.constant 0 : index
    %c0_13 = arith.constant 0 : index
    %15 = vector.load %arg6[%c0_12, %c0_13] : memref<128x128xf32, #tpu.memory_space<vmem>>, vector<128x128xf32>
    %c0_14 = arith.constant 0 : index
    %c0_15 = arith.constant 0 : index
    %16 = vector.load %arg7[%c0_14, %c0_15] : memref<1x128xf32, #tpu.memory_space<vmem>>, vector<1x128xf32>
    %cst_16 = arith.constant dense<0.000000e+00> : vector<8x128xf32>
    %17 = tpu.matmul %14, %15, %cst_16 {dimension_numbers = #tpu.dot_dimension_numbers<[1], [0], [0], [1], [0, 0, 1, 1], [], []>} : vector<8x128xf32>, vector<128x128xf32>, vector<8x128xf32> -> vector<8x128xf32>
    %18 = vector.broadcast %16 : vector<1x128xf32> to vector<8x128xf32>
    %19 = arith.addf %17, %18 : vector<8x128xf32>
    %c0_17 = arith.constant 0 : index
    %c0_18 = arith.constant 0 : index
    %20 = vector.load %arg8[%c0_17, %c0_18] : memref<8x128xf32, #tpu.memory_space<vmem>>, vector<8x128xf32>
    tpu.vector_store %arg8[%c0_17, %c0_18], %19 {strides = array<i32>} : memref<8x128xf32, #tpu.memory_space<vmem>>, vector<8x128xf32>,
    return
  }
  func.func @transform_0(%arg0: i32) -> (i32, i32) {
    %c0_i32 = arith.constant 0 : i32
    %c0_i32_0 = arith.constant 0 : i32
    return %arg0, %c0_i32 : i32, i32
  }
  func.func @transform_1(%arg0: i32) -> (i32, i32) {
    %c0_i32 = arith.constant 0 : i32
    %c0_i32_0 = arith.constant 0 : i32
    %c0_i32_1 = arith.constant 0 : i32
    return %c0_i32, %c0_i32_0 : i32, i32
  }
  func.func @transform_2(%arg0: i32) -> (i32, i32) {
    %c0_i32 = arith.constant 0 : i32
    %c0_i32_0 = arith.constant 0 : i32
    %c0_i32_1 = arith.constant 0 : i32
    return %c0_i32, %c0_i32_0 : i32, i32
  }
  func.func @transform_3(%arg0: i32) -> (i32, i32) {
    %c0_i32 = arith.constant 0 : i32
    %c0_i32_0 = arith.constant 0 : i32
    %c0_i32_1 = arith.constant 0 : i32
    return %c0_i32, %c0_i32_0 : i32, i32
  }
  func.func @transform_4(%arg0: i32) -> (i32, i32) {
    %c0_i32 = arith.constant 0 : i32
    %c0_i32_0 = arith.constant 0 : i32
    %c0_i32_1 = arith.constant 0 : i32
    return %c0_i32, %c0_i32_0 : i32, i32
  }
  func.func @transform_5(%arg0: i32) -> (i32, i32) {
    %c0_i32 = arith.constant 0 : i32
    %c0_i32_0 = arith.constant 0 : i32
    %c0_i32_1 = arith.constant 0 : i32
    return %c0_i32, %c0_i32_0 : i32, i32
  }
  func.func @transform_6(%arg0: i32) -> (i32, i32) {
    %c0_i32 = arith.constant 0 : i32
    %c0_i32_0 = arith.constant 0 : i32
    %c0_i32_1 = arith.constant 0 : i32
    return %c0_i32, %c0_i32_0 : i32, i32
  }
  func.func @transform_7(%arg0: i32) -> (i32, i32) {
    %c0_i32 = arith.constant 0 : i32
    %c0_i32_0 = arith.constant 0 : i32
    return %arg0, %c0_i32 : i32, i32
  }
}

module attributes {stable_mosaic.version = 11 : i64} {
  func.func @_tiled_linear_kernel(%arg0: i32, %arg1: i32, %arg2: i32, %arg3: memref<8x128xf32, #tpu.memory_space<vmem>>, %arg4: memref<128x128xf32, #tpu.memory_space<vmem>>, %arg5: memref<1x128xf32, #tpu.memory_space<vmem>>, %arg6: memref<8x128xf32, #tpu.memory_space<vmem>>, %arg7: memref<8x128xf32, #tpu.memory_space<vmem>>) attributes {dimension_semantics = [#tpu.dimension_semantics<parallel>, #tpu.dimension_semantics<parallel>, #tpu.dimension_semantics<arbitrary>], iteration_bounds = array<i64: 1, 1, 1>, scalar_prefetch = 0 : i64, scratch_operands = 1 : i64, tpu.core_type = #tpu.core_type<tc>, window_params = [{transform_indices = @transform_0, window_bounds = array<i64: 8, 128>}, {transform_indices = @transform_1, window_bounds = array<i64: 128, 128>}, {transform_indices = @transform_2, window_bounds = array<i64: 1, 128>}, {transform_indices = @transform_3, window_bounds = array<i64: 8, 128>}]} {
    %c0_i32 = arith.constant 0 : i32
    %0 = arith.cmpi eq, %arg2, %c0_i32 : i32
    %1 = arith.extui %0 : i1 to i32
    %c0_i32_0 = arith.constant 0 : i32
    %2 = arith.cmpi ne, %1, %c0_i32_0 : i32
    scf.if %2 {
      %cst_10 = arith.constant 0.000000e+00 : f32
      %12 = vector.broadcast %cst_10 : f32 to vector<8x128xf32>
      %c0_11 = arith.constant 0 : index
      %c0_12 = arith.constant 0 : index
      %13 = vector.load %arg7[%c0_11, %c0_12] : memref<8x128xf32, #tpu.memory_space<vmem>>, vector<8x128xf32>
      tpu.vector_store %arg7[%c0_11, %c0_12], %12 {strides = array<i32>} : memref<8x128xf32, #tpu.memory_space<vmem>>, vector<8x128xf32>,
    } else {
    }
    %c0 = arith.constant 0 : index
    %c0_1 = arith.constant 0 : index
    %3 = vector.load %arg7[%c0, %c0_1] : memref<8x128xf32, #tpu.memory_space<vmem>>, vector<8x128xf32>
    %c0_2 = arith.constant 0 : index
    %c0_3 = arith.constant 0 : index
    %4 = vector.load %arg3[%c0_2, %c0_3] : memref<8x128xf32, #tpu.memory_space<vmem>>, vector<8x128xf32>
    %c0_4 = arith.constant 0 : index
    %c0_5 = arith.constant 0 : index
    %5 = vector.load %arg4[%c0_4, %c0_5] : memref<128x128xf32, #tpu.memory_space<vmem>>, vector<128x128xf32>
    %cst = arith.constant dense<0.000000e+00> : vector<8x128xf32>
    %6 = tpu.matmul %4, %5, %cst {dimension_numbers = #tpu.dot_dimension_numbers<[1], [0], [0], [1], [0, 0, 1, 1], [], []>} : vector<8x128xf32>, vector<128x128xf32>, vector<8x128xf32> -> vector<8x128xf32>
    %7 = arith.addf %3, %6 : vector<8x128xf32>
    %c0_6 = arith.constant 0 : index
    %c0_7 = arith.constant 0 : index
    %8 = vector.load %arg7[%c0_6, %c0_7] : memref<8x128xf32, #tpu.memory_space<vmem>>, vector<8x128xf32>
    tpu.vector_store %arg7[%c0_6, %c0_7], %7 {strides = array<i32>} : memref<8x128xf32, #tpu.memory_space<vmem>>, vector<8x128xf32>,
    %c0_i32_8 = arith.constant 0 : i32
    %9 = arith.cmpi eq, %arg2, %c0_i32_8 : i32
    %10 = arith.extui %9 : i1 to i32
    %c0_i32_9 = arith.constant 0 : i32
    %11 = arith.cmpi ne, %10, %c0_i32_9 : i32
    scf.if %11 {
      %c0_10 = arith.constant 0 : index
      %c0_11 = arith.constant 0 : index
      %12 = vector.load %arg7[%c0_10, %c0_11] : memref<8x128xf32, #tpu.memory_space<vmem>>, vector<8x128xf32>
      %c0_12 = arith.constant 0 : index
      %c0_13 = arith.constant 0 : index
      %13 = vector.load %arg5[%c0_12, %c0_13] : memref<1x128xf32, #tpu.memory_space<vmem>>, vector<1x128xf32>
      %14 = vector.broadcast %13 : vector<1x128xf32> to vector<8x128xf32>
      %15 = arith.addf %12, %14 : vector<8x128xf32>
      %cst_14 = arith.constant 0.000000e+00 : f32
      %16 = vector.broadcast %cst_14 : f32 to vector<8x128xf32>
      %17 = arith.maximumf %15, %16 : vector<8x128xf32>
      %c0_15 = arith.constant 0 : index
      %c0_16 = arith.constant 0 : index
      %18 = vector.load %arg6[%c0_15, %c0_16] : memref<8x128xf32, #tpu.memory_space<vmem>>, vector<8x128xf32>
      tpu.vector_store %arg6[%c0_15, %c0_16], %17 {strides = array<i32>} : memref<8x128xf32, #tpu.memory_space<vmem>>, vector<8x128xf32>,
    } else {
    }
    return
  }
  func.func @transform_0(%arg0: i32, %arg1: i32, %arg2: i32) -> (i32, i32) {
    %c0_i32 = arith.constant 0 : i32
    return %arg0, %arg2 : i32, i32
  }
  func.func @transform_1(%arg0: i32, %arg1: i32, %arg2: i32) -> (i32, i32) {
    %c0_i32 = arith.constant 0 : i32
    return %arg2, %arg1 : i32, i32
  }
  func.func @transform_2(%arg0: i32, %arg1: i32, %arg2: i32) -> (i32, i32) {
    %c0_i32 = arith.constant 0 : i32
    %c0_i32_0 = arith.constant 0 : i32
    return %c0_i32, %arg1 : i32, i32
  }
  func.func @transform_3(%arg0: i32, %arg1: i32, %arg2: i32) -> (i32, i32) {
    %c0_i32 = arith.constant 0 : i32
    return %arg0, %arg1 : i32, i32
  }
}

module attributes {stable_mosaic.version = 11 : i64} {
  func.func @_tiled_linear_kernel(%arg0: i32, %arg1: i32, %arg2: i32, %arg3: memref<8x128xf32, #tpu.memory_space<vmem>>, %arg4: memref<128x128xf32, #tpu.memory_space<vmem>>, %arg5: memref<1x128xf32, #tpu.memory_space<vmem>>, %arg6: memref<8x128xf32, #tpu.memory_space<vmem>>, %arg7: memref<8x128xf32, #tpu.memory_space<vmem>>) attributes {dimension_semantics = [#tpu.dimension_semantics<parallel>, #tpu.dimension_semantics<parallel>, #tpu.dimension_semantics<arbitrary>], iteration_bounds = array<i64: 1, 1, 1>, scalar_prefetch = 0 : i64, scratch_operands = 1 : i64, tpu.core_type = #tpu.core_type<tc>, window_params = [{transform_indices = @transform_0, window_bounds = array<i64: 8, 128>}, {transform_indices = @transform_1, window_bounds = array<i64: 128, 128>}, {transform_indices = @transform_2, window_bounds = array<i64: 1, 128>}, {transform_indices = @transform_3, window_bounds = array<i64: 8, 128>}]} {
    %c0_i32 = arith.constant 0 : i32
    %0 = arith.cmpi eq, %arg2, %c0_i32 : i32
    %1 = arith.extui %0 : i1 to i32
    %c0_i32_0 = arith.constant 0 : i32
    %2 = arith.cmpi ne, %1, %c0_i32_0 : i32
    scf.if %2 {
      %cst_10 = arith.constant 0.000000e+00 : f32
      %12 = vector.broadcast %cst_10 : f32 to vector<8x128xf32>
      %c0_11 = arith.constant 0 : index
      %c0_12 = arith.constant 0 : index
      %13 = vector.load %arg7[%c0_11, %c0_12] : memref<8x128xf32, #tpu.memory_space<vmem>>, vector<8x128xf32>
      tpu.vector_store %arg7[%c0_11, %c0_12], %12 {strides = array<i32>} : memref<8x128xf32, #tpu.memory_space<vmem>>, vector<8x128xf32>,
    } else {
    }
    %c0 = arith.constant 0 : index
    %c0_1 = arith.constant 0 : index
    %3 = vector.load %arg7[%c0, %c0_1] : memref<8x128xf32, #tpu.memory_space<vmem>>, vector<8x128xf32>
    %c0_2 = arith.constant 0 : index
    %c0_3 = arith.constant 0 : index
    %4 = vector.load %arg3[%c0_2, %c0_3] : memref<8x128xf32, #tpu.memory_space<vmem>>, vector<8x128xf32>
    %c0_4 = arith.constant 0 : index
    %c0_5 = arith.constant 0 : index
    %5 = vector.load %arg4[%c0_4, %c0_5] : memref<128x128xf32, #tpu.memory_space<vmem>>, vector<128x128xf32>
    %cst = arith.constant dense<0.000000e+00> : vector<8x128xf32>
    %6 = tpu.matmul %4, %5, %cst {dimension_numbers = #tpu.dot_dimension_numbers<[1], [0], [0], [1], [0, 0, 1, 1], [], []>} : vector<8x128xf32>, vector<128x128xf32>, vector<8x128xf32> -> vector<8x128xf32>
    %7 = arith.addf %3, %6 : vector<8x128xf32>
    %c0_6 = arith.constant 0 : index
    %c0_7 = arith.constant 0 : index
    %8 = vector.load %arg7[%c0_6, %c0_7] : memref<8x128xf32, #tpu.memory_space<vmem>>, vector<8x128xf32>
    tpu.vector_store %arg7[%c0_6, %c0_7], %7 {strides = array<i32>} : memref<8x128xf32, #tpu.memory_space<vmem>>, vector<8x128xf32>,
    %c0_i32_8 = arith.constant 0 : i32
    %9 = arith.cmpi eq, %arg2, %c0_i32_8 : i32
    %10 = arith.extui %9 : i1 to i32
    %c0_i32_9 = arith.constant 0 : i32
    %11 = arith.cmpi ne, %10, %c0_i32_9 : i32
    scf.if %11 {
      %c0_10 = arith.constant 0 : index
      %c0_11 = arith.constant 0 : index
      %12 = vector.load %arg7[%c0_10, %c0_11] : memref<8x128xf32, #tpu.memory_space<vmem>>, vector<8x128xf32>
      %c0_12 = arith.constant 0 : index
      %c0_13 = arith.constant 0 : index
      %13 = vector.load %arg5[%c0_12, %c0_13] : memref<1x128xf32, #tpu.memory_space<vmem>>, vector<1x128xf32>
      %14 = vector.broadcast %13 : vector<1x128xf32> to vector<8x128xf32>
      %15 = arith.addf %12, %14 : vector<8x128xf32>
      %cst_14 = arith.constant 0.000000e+00 : f32
      %16 = vector.broadcast %cst_14 : f32 to vector<8x128xf32>
      %17 = arith.maximumf %15, %16 : vector<8x128xf32>
      %c0_15 = arith.constant 0 : index
      %c0_16 = arith.constant 0 : index
      %18 = vector.load %arg6[%c0_15, %c0_16] : memref<8x128xf32, #tpu.memory_space<vmem>>, vector<8x128xf32>
      tpu.vector_store %arg6[%c0_15, %c0_16], %17 {strides = array<i32>} : memref<8x128xf32, #tpu.memory_space<vmem>>, vector<8x128xf32>,
    } else {
    }
    return
  }
  func.func @transform_0(%arg0: i32, %arg1: i32, %arg2: i32) -> (i32, i32) {
    %c0_i32 = arith.constant 0 : i32
    return %arg0, %arg2 : i32, i32
  }
  func.func @transform_1(%arg0: i32, %arg1: i32, %arg2: i32) -> (i32, i32) {
    %c0_i32 = arith.constant 0 : i32
    return %arg2, %arg1 : i32, i32
  }
  func.func @transform_2(%arg0: i32, %arg1: i32, %arg2: i32) -> (i32, i32) {
    %c0_i32 = arith.constant 0 : i32
    %c0_i32_0 = arith.constant 0 : i32
    return %c0_i32, %arg1 : i32, i32
  }
  func.func @transform_3(%arg0: i32, %arg1: i32, %arg2: i32) -> (i32, i32) {
    %c0_i32 = arith.constant 0 : i32
    return %arg0, %arg1 : i32, i32
  }
}

module attributes {stable_mosaic.version = 11 : i64} {
  func.func @_tiled_linear_kernel(%arg0: i32, %arg1: i32, %arg2: i32, %arg3: memref<8x128xf32, #tpu.memory_space<vmem>>, %arg4: memref<128x128xf32, #tpu.memory_space<vmem>>, %arg5: memref<1x128xf32, #tpu.memory_space<vmem>>, %arg6: memref<8x128xf32, #tpu.memory_space<vmem>>, %arg7: memref<8x128xf32, #tpu.memory_space<vmem>>) attributes {dimension_semantics = [#tpu.dimension_semantics<parallel>, #tpu.dimension_semantics<parallel>, #tpu.dimension_semantics<arbitrary>], iteration_bounds = array<i64: 1, 1, 1>, scalar_prefetch = 0 : i64, scratch_operands = 1 : i64, tpu.core_type = #tpu.core_type<tc>, window_params = [{transform_indices = @transform_0, window_bounds = array<i64: 8, 128>}, {transform_indices = @transform_1, window_bounds = array<i64: 128, 128>}, {transform_indices = @transform_2, window_bounds = array<i64: 1, 128>}, {transform_indices = @transform_3, window_bounds = array<i64: 8, 128>}]} {
    %c0_i32 = arith.constant 0 : i32
    %0 = arith.cmpi eq, %arg2, %c0_i32 : i32
    %1 = arith.extui %0 : i1 to i32
    %c0_i32_0 = arith.constant 0 : i32
    %2 = arith.cmpi ne, %1, %c0_i32_0 : i32
    scf.if %2 {
      %cst_10 = arith.constant 0.000000e+00 : f32
      %12 = vector.broadcast %cst_10 : f32 to vector<8x128xf32>
      %c0_11 = arith.constant 0 : index
      %c0_12 = arith.constant 0 : index
      %13 = vector.load %arg7[%c0_11, %c0_12] : memref<8x128xf32, #tpu.memory_space<vmem>>, vector<8x128xf32>
      tpu.vector_store %arg7[%c0_11, %c0_12], %12 {strides = array<i32>} : memref<8x128xf32, #tpu.memory_space<vmem>>, vector<8x128xf32>,
    } else {
    }
    %c0 = arith.constant 0 : index
    %c0_1 = arith.constant 0 : index
    %3 = vector.load %arg7[%c0, %c0_1] : memref<8x128xf32, #tpu.memory_space<vmem>>, vector<8x128xf32>
    %c0_2 = arith.constant 0 : index
    %c0_3 = arith.constant 0 : index
    %4 = vector.load %arg3[%c0_2, %c0_3] : memref<8x128xf32, #tpu.memory_space<vmem>>, vector<8x128xf32>
    %c0_4 = arith.constant 0 : index
    %c0_5 = arith.constant 0 : index
    %5 = vector.load %arg4[%c0_4, %c0_5] : memref<128x128xf32, #tpu.memory_space<vmem>>, vector<128x128xf32>
    %cst = arith.constant dense<0.000000e+00> : vector<8x128xf32>
    %6 = tpu.matmul %4, %5, %cst {dimension_numbers = #tpu.dot_dimension_numbers<[1], [0], [0], [1], [0, 0, 1, 1], [], []>} : vector<8x128xf32>, vector<128x128xf32>, vector<8x128xf32> -> vector<8x128xf32>
    %7 = arith.addf %3, %6 : vector<8x128xf32>
    %c0_6 = arith.constant 0 : index
    %c0_7 = arith.constant 0 : index
    %8 = vector.load %arg7[%c0_6, %c0_7] : memref<8x128xf32, #tpu.memory_space<vmem>>, vector<8x128xf32>
    tpu.vector_store %arg7[%c0_6, %c0_7], %7 {strides = array<i32>} : memref<8x128xf32, #tpu.memory_space<vmem>>, vector<8x128xf32>,
    %c0_i32_8 = arith.constant 0 : i32
    %9 = arith.cmpi eq, %arg2, %c0_i32_8 : i32
    %10 = arith.extui %9 : i1 to i32
    %c0_i32_9 = arith.constant 0 : i32
    %11 = arith.cmpi ne, %10, %c0_i32_9 : i32
    scf.if %11 {
      %c0_10 = arith.constant 0 : index
      %c0_11 = arith.constant 0 : index
      %12 = vector.load %arg7[%c0_10, %c0_11] : memref<8x128xf32, #tpu.memory_space<vmem>>, vector<8x128xf32>
      %c0_12 = arith.constant 0 : index
      %c0_13 = arith.constant 0 : index
      %13 = vector.load %arg5[%c0_12, %c0_13] : memref<1x128xf32, #tpu.memory_space<vmem>>, vector<1x128xf32>
      %14 = vector.broadcast %13 : vector<1x128xf32> to vector<8x128xf32>
      %15 = arith.addf %12, %14 : vector<8x128xf32>
      %c0_14 = arith.constant 0 : index
      %c0_15 = arith.constant 0 : index
      %16 = vector.load %arg6[%c0_14, %c0_15] : memref<8x128xf32, #tpu.memory_space<vmem>>, vector<8x128xf32>
      tpu.vector_store %arg6[%c0_14, %c0_15], %15 {strides = array<i32>} : memref<8x128xf32, #tpu.memory_space<vmem>>, vector<8x128xf32>,
    } else {
    }
    return
  }
  func.func @transform_0(%arg0: i32, %arg1: i32, %arg2: i32) -> (i32, i32) {
    %c0_i32 = arith.constant 0 : i32
    return %arg0, %arg2 : i32, i32
  }
  func.func @transform_1(%arg0: i32, %arg1: i32, %arg2: i32) -> (i32, i32) {
    %c0_i32 = arith.constant 0 : i32
    return %arg2, %arg1 : i32, i32
  }
  func.func @transform_2(%arg0: i32, %arg1: i32, %arg2: i32) -> (i32, i32) {
    %c0_i32 = arith.constant 0 : i32
    %c0_i32_0 = arith.constant 0 : i32
    return %c0_i32, %arg1 : i32, i32
  }
  func.func @transform_3(%arg0: i32, %arg1: i32, %arg2: i32) -> (i32, i32) {
    %c0_i32 = arith.constant 0 : i32
    return %arg0, %arg1 : i32, i32
  }
}

</mosaic_0001>

<llo_original>
// kernel: _fused_forward.1
$region0: #{_fused_forward.1}
  #allocation0 [shape = 'u32[]', space=smem, size = 0x4, offset = 0x4, fixed_abs, tag = 'smem constant byte address 0x4 - core index']
  #allocation1 [shape = 'u32[144,128]{1,0:T(1,128)}', space=vmem, size = 0x12000, scoped, tag = 'internal scratch']
  %s0 = inlined_call_operand.vmem [shape: f32[8,128], index: 0, kind: input, shape index: {}]
  %s1 = inlined_call_operand.hbm [shape: f32[128,128], index: 1, kind: input, shape index: {}]
  %s2 = inlined_call_operand.vmem [shape: f32[1,128], index: 2, kind: input, shape index: {}]
  %s3 = inlined_call_operand.hbm [shape: f32[128,128], index: 3, kind: input, shape index: {}]
  %s4 = inlined_call_operand.vmem [shape: f32[1,128], index: 4, kind: input, shape index: {}]
  %s5 = inlined_call_operand.hbm [shape: f32[128,128], index: 5, kind: input, shape index: {}]
  %s6 = inlined_call_operand.vmem [shape: f32[1,128], index: 6, kind: input, shape index: {}]
  %s7 = inlined_call_operand.hbm [shape: f32[8,128], index: 7, kind: output, shape index: {}]
  %s8 = sld [smem:[#allocation0]]
  $region50: #{_fused_forward.1} parent=0
    _
  %s10 = ssub.s32 1, %s8
  %s11 = scalar_select 0, %s10, %s8
  $region1: #{_fused_forward.1} parent=0
    #allocation2 [shape = 'u8[65536]{0}', space=vmem, size = 0x10000, scoped, tag = 'input window, operand 1, single buffered']
    #allocation3 [shape = 's32[1]{0}', space=sflag, size = 0x4, scoped, tag = 'scoped memory for _fused_forward.1']
    #allocation4 [shape = 's32[1]{0}', space=sflag, size = 0x4, scoped, tag = 'scoped memory for _fused_forward.1']
    #allocation5 [shape = 'u8[65536]{0}', space=vmem, size = 0x10000, scoped, tag = 'input window, operand 3, single buffered']
    #allocation6 [shape = 's32[1]{0}', space=sflag, size = 0x4, scoped, tag = 'scoped memory for _fused_forward.1']
    #allocation7 [shape = 'u8[65536]{0}', space=vmem, size = 0x10000, scoped, tag = 'input window, operand 5, single buffered']
    #allocation8 [shape = 'u8[4096]{0}', space=vmem, size = 0x1000, scoped, tag = 'output window, operand 0, single buffered']
    %12 = vsyncpa [#allocation3], 0
    %13 = vsyncpa [#allocation6], 0
    %14 = vsyncpa [#allocation4], 0
    // Predicated region
    $region2: #{_fused_forward.1} parent=1 // pred_check
      _
    $region3: #{_fused_forward.1} parent=1 // pred_check_branch
      %16 = sbr.rel (0) target = $region5
    $region4: #{_fused_forward.1} parent=1 // pred_region
      _
    $region5: #{_fused_forward.1} parent=1 // pred_fallthru
      _
    // Predicated region
    $region6: #{_fused_forward.1} parent=1 // pred_check
      _
    $region7: #{_fused_forward.1} parent=1 // pred_check_branch
      %18 = sbr.rel (0) target = $region9
    $region8: #{_fused_forward.1} parent=1 // pred_region
      %s20 = ssub.s32 2048, 2048
      %21 = vsyncadd [#allocation3], %s20
      %s22 = sshll.u32 [#allocation2], 4
      %s23 = int_to_ptr.vmem [resolvable:$true] %s22
      %28 = dma.hbm_to_vmem [thread:$0]  %s1, 2048, %s23, [#allocation3], 128, 128, 8
    $region9: #{_fused_forward.1} parent=1 // pred_fallthru
      _
    // Predicated region
    $region10: #{_fused_forward.1} parent=1 // pred_check
      _
    $region11: #{_fused_forward.1} parent=1 // pred_check_branch
      %30 = sbr.rel (0) target = $region13
    $region12: #{_fused_forward.1} parent=1 // pred_region
      _
    $region13: #{_fused_forward.1} parent=1 // pred_fallthru
      _
    // Predicated region
    $region14: #{_fused_forward.1} parent=1 // pred_check
      _
    $region15: #{_fused_forward.1} parent=1 // pred_check_branch
      %32 = sbr.rel (0) target = $region17
    $region16: #{_fused_forward.1} parent=1 // pred_region
      %s34 = ssub.s32 2048, 2048
      %35 = vsyncadd [#allocation6], %s34
      %s36 = sshll.u32 [#allocation5], 4
      %s37 = int_to_ptr.vmem [resolvable:$true] %s36
      %42 = dma.hbm_to_vmem [thread:$0]  %s3, 2048, %s37, [#allocation6], 128, 128, 8
    $region17: #{_fused_forward.1} parent=1 // pred_fallthru
      _
    // Predicated region
    $region18: #{_fused_forward.1} parent=1 // pred_check
      _
    $region19: #{_fused_forward.1} parent=1 // pred_check_branch
      %44 = sbr.rel (0) target = $region21
    $region20: #{_fused_forward.1} parent=1 // pred_region
      _
    $region21: #{_fused_forward.1} parent=1 // pred_fallthru
      _
    // Predicated region
    $region22: #{_fused_forward.1} parent=1 // pred_check
      _
    $region23: #{_fused_forward.1} parent=1 // pred_check_branch
      %46 = sbr.rel (0) target = $region25
    $region24: #{_fused_forward.1} parent=1 // pred_region
      %s48 = ssub.s32 2048, 2048
      %49 = vsyncadd [#allocation6], %s48
      %s50 = sshll.u32 [#allocation7], 4
      %s51 = int_to_ptr.vmem [resolvable:$true] %s50
      %56 = dma.hbm_to_vmem [thread:$0]  %s5, 2048, %s51, [#allocation6], 128, 128, 8
    $region25: #{_fused_forward.1} parent=1 // pred_fallthru
      _
    // Predicated region
    $region26: #{_fused_forward.1} parent=1 // pred_check
      _
    $region27: #{_fused_forward.1} parent=1 // pred_check_branch
      %58 = sbr.rel (0) target = $region29
    $region28: #{_fused_forward.1} parent=1 // pred_region
      _
    $region29: #{_fused_forward.1} parent=1 // pred_fallthru
      _
    // Predicated region
    $region30: #{_fused_forward.1} parent=1 // pred_check
      _
    $region31: #{_fused_forward.1} parent=1 // pred_check_branch
      %60 = sbr.rel (0) target = $region33
    $region32: #{_fused_forward.1} parent=1 // pred_region
      %61 = dma.done [#allocation3], 2048
    $region33: #{_fused_forward.1} parent=1 // pred_fallthru
      _
    // Predicated region
    $region34: #{_fused_forward.1} parent=1 // pred_check
      _
    $region35: #{_fused_forward.1} parent=1 // pred_check_branch
      %63 = sbr.rel (0) target = $region37
    $region36: #{_fused_forward.1} parent=1 // pred_region
      %64 = dma.done [#allocation6], 2048
    $region37: #{_fused_forward.1} parent=1 // pred_fallthru
      _
    // Predicated region
    $region38: #{_fused_forward.1} parent=1 // pred_check
      _
    $region39: #{_fused_forward.1} parent=1 // pred_check_branch
      %66 = sbr.rel (0) target = $region41
    $region40: #{_fused_forward.1} parent=1 // pred_region
      %67 = dma.done [#allocation6], 2048
    $region41: #{_fused_forward.1} parent=1 // pred_fallthru
      _
    %v68 = vld [vmem:[%s0] sm:$0xff]
    %v69 = vld [vmem:[#allocation2] sm:$0xff]
    %v70 = vld [vmem:[#allocation2 + $0x8] sm:$0xff]
    %v71 = vld [vmem:[#allocation2 + $0x10] sm:$0xff]
    %v72 = vld [vmem:[#allocation2 + $0x18] sm:$0xff]
    %v73 = vld [vmem:[#allocation2 + $0x20] sm:$0xff]
    %v74 = vld [vmem:[#allocation2 + $0x28] sm:$0xff]
    %v75 = vld [vmem:[#allocation2 + $0x30] sm:$0xff]
    %v76 = vld [vmem:[#allocation2 + $0x38] sm:$0xff]
    %v77 = vld [vmem:[#allocation2 + $0x40] sm:$0xff]
    %v78 = vld [vmem:[#allocation2 + $0x48] sm:$0xff]
    %v79 = vld [vmem:[#allocation2 + $0x50] sm:$0xff]
    %v80 = vld [vmem:[#allocation2 + $0x58] sm:$0xff]
    %v81 = vld [vmem:[#allocation2 + $0x60] sm:$0xff]
    %v82 = vld [vmem:[#allocation2 + $0x68] sm:$0xff]
    %v83 = vld [vmem:[#allocation2 + $0x70] sm:$0xff]
    %v84 = vld [vmem:[#allocation2 + $0x78] sm:$0xff]
    %v85 = vld [vmem:[%s2] sm:$0x1]
    %v87 = vlaneseq
    %v88 = vshrl.u32 %v87, 7
    %v89 = vsub.s32 0, %v88
    %v90 = vrot.slane %v85, %v89
    %92 = vmatprep.subr.mxu0 0.0
    %93 = vmatpush1.msra.mxu0 %v84
    %94 = vmatprep.subr.mxu0 0.0
    %95 = vmatpush1.msra.mxu0 %v83
    %96 = vmatprep.subr.mxu0 0.0
    %97 = vmatpush1.msra.mxu0 %v82
    %98 = vmatprep.subr.mxu0 0.0
    %99 = vmatpush1.msra.mxu0 %v81
    %100 = vmatprep.subr.mxu0 0.0
    %101 = vmatpush1.msra.mxu0 %v80
    %102 = vmatprep.subr.mxu0 0.0
    %103 = vmatpush1.msra.mxu0 %v79
    %104 = vmatprep.subr.mxu0 0.0
    %105 = vmatpush1.msra.mxu0 %v78
    %106 = vmatprep.subr.mxu0 0.0
    %107 = vmatpush1.msra.mxu0 %v77
    %108 = vmatprep.subr.mxu0 0.0
    %109 = vmatpush1.msra.mxu0 %v76
    %110 = vmatprep.subr.mxu0 0.0
    %111 = vmatpush1.msra.mxu0 %v75
    %112 = vmatprep.subr.mxu0 0.0
    %113 = vmatpush1.msra.mxu0 %v74
    %114 = vmatprep.subr.mxu0 0.0
    %115 = vmatpush1.msra.mxu0 %v73
    %116 = vmatprep.subr.mxu0 0.0
    %117 = vmatpush1.msra.mxu0 %v72
    %118 = vmatprep.subr.mxu0 0.0
    %119 = vmatpush1.msra.mxu0 %v71
    %120 = vmatprep.subr.mxu0 0.0
    %121 = vmatpush1.msra.mxu0 %v70
    %122 = vmatprep.subr.mxu0 0.0
    %123 = vmatpush1.msra.mxu0 %v69
    %124 = vmatprep.subr.mxu0 0.0
    %125 = vmatpush2.msra.mxu0 0.0
    %126 = vmatprep.subr.mxu0 0.0
    %127 = vmatpush2.msra.mxu0 0.0
    %128 = vmatprep.subr.mxu0 0.0
    %129 = vmatpush2.msra.mxu0 0.0
    %130 = vmatprep.subr.mxu0 0.0
    %131 = vmatpush2.msra.mxu0 0.0
    %132 = vmatprep.subr.mxu0 0.0
    %133 = vmatpush2.msra.mxu0 0.0
    %134 = vmatprep.subr.mxu0 0.0
    %135 = vmatpush2.msra.mxu0 0.0
    %136 = vmatprep.subr.mxu0 0.0
    %137 = vmatpush2.msra.mxu0 0.0
    %138 = vmatprep.subr.mxu0 0.0
    %139 = vmatpush2.msra.mxu0 0.0
    %140 = vmatprep.subr.mxu0 0.0
    %141 = vmatpush2.msra.mxu0 0.0
    %142 = vmatprep.subr.mxu0 0.0
    %143 = vmatpush2.msra.mxu0 0.0
    %144 = vmatprep.subr.mxu0 0.0
    %145 = vmatpush2.msra.mxu0 0.0
    %146 = vmatprep.subr.mxu0 0.0
    %147 = vmatpush2.msra.mxu0 0.0
    %148 = vmatprep.subr.mxu0 0.0
    %149 = vmatpush2.msra.mxu0 0.0
    %150 = vmatprep.subr.mxu0 0.0
    %151 = vmatpush2.msra.mxu0 0.0
    %152 = vmatprep.subr.mxu0 0.0
    %153 = vmatpush2.msra.mxu0 0.0
    %154 = vmatprep.subr.mxu0 0.0
    %155 = vmatpush2.msra.mxu0 0.0
    %156 = vmatprep.mubr.f32.mxu0 0.0
    %157 = vmatmul.mubr.f32.gmra.mxu0 %v68
    %v158 = vpop.f32.mrf.mxu0
    %v159 = vadd.f32 %v90, %v158
    %v160 = vpop.f32.mrf.mxu0
    %161 = vdwg.mxu0
    %v162 = vmax.f32 %v159, 0.0
    %v163 = vld [vmem:[#allocation5] sm:$0xff]
    %v164 = vld [vmem:[#allocation5 + $0x8] sm:$0xff]
    %v165 = vld [vmem:[#allocation5 + $0x10] sm:$0xff]
    %v166 = vld [vmem:[#allocation5 + $0x18] sm:$0xff]
    %v167 = vld [vmem:[#allocation5 + $0x20] sm:$0xff]
    %v168 = vld [vmem:[#allocation5 + $0x28] sm:$0xff]
    %v169 = vld [vmem:[#allocation5 + $0x30] sm:$0xff]
    %v170 = vld [vmem:[#allocation5 + $0x38] sm:$0xff]
    %v171 = vld [vmem:[#allocation5 + $0x40] sm:$0xff]
    %v172 = vld [vmem:[#allocation5 + $0x48] sm:$0xff]
    %v173 = vld [vmem:[#allocation5 + $0x50] sm:$0xff]
    %v174 = vld [vmem:[#allocation5 + $0x58] sm:$0xff]
    %v175 = vld [vmem:[#allocation5 + $0x60] sm:$0xff]
    %v176 = vld [vmem:[#allocation5 + $0x68] sm:$0xff]
    %v177 = vld [vmem:[#allocation5 + $0x70] sm:$0xff]
    %v178 = vld [vmem:[#allocation5 + $0x78] sm:$0xff]
    %v179 = vld [vmem:[%s4] sm:$0x1]
    %v181 = vlaneseq
    %v182 = vshrl.u32 %v181, 7
    %v183 = vsub.s32 0, %v182
    %v184 = vrot.slane %v179, %v183
    %186 = vmatprep.subr.mxu0 0.0
    %187 = vmatpush1.msra.mxu0 %v178
    %188 = vmatprep.subr.mxu0 0.0
    %189 = vmatpush1.msra.mxu0 %v177
    %190 = vmatprep.subr.mxu0 0.0
    %191 = vmatpush1.msra.mxu0 %v176
    %192 = vmatprep.subr.mxu0 0.0
    %193 = vmatpush1.msra.mxu0 %v175
    %194 = vmatprep.subr.mxu0 0.0
    %195 = vmatpush1.msra.mxu0 %v174
    %196 = vmatprep.subr.mxu0 0.0
    %197 = vmatpush1.msra.mxu0 %v173
    %198 = vmatprep.subr.mxu0 0.0
    %199 = vmatpush1.msra.mxu0 %v172
    %200 = vmatprep.subr.mxu0 0.0
    %201 = vmatpush1.msra.mxu0 %v171
    %202 = vmatprep.subr.mxu0 0.0
    %203 = vmatpush1.msra.mxu0 %v170
    %204 = vmatprep.subr.mxu0 0.0
    %205 = vmatpush1.msra.mxu0 %v169
    %206 = vmatprep.subr.mxu0 0.0
    %207 = vmatpush1.msra.mxu0 %v168
    %208 = vmatprep.subr.mxu0 0.0
    %209 = vmatpush1.msra.mxu0 %v167
    %210 = vmatprep.subr.mxu0 0.0
    %211 = vmatpush1.msra.mxu0 %v166
    %212 = vmatprep.subr.mxu0 0.0
    %213 = vmatpush1.msra.mxu0 %v165
    %214 = vmatprep.subr.mxu0 0.0
    %215 = vmatpush1.msra.mxu0 %v164
    %216 = vmatprep.subr.mxu0 0.0
    %217 = vmatpush1.msra.mxu0 %v163
    %218 = vmatprep.subr.mxu0 0.0
    %219 = vmatpush2.msra.mxu0 0.0
    %220 = vmatprep.subr.mxu0 0.0
    %221 = vmatpush2.msra.mxu0 0.0
    %222 = vmatprep.subr.mxu0 0.0
    %223 = vmatpush2.msra.mxu0 0.0
    %224 = vmatprep.subr.mxu0 0.0
    %225 = vmatpush2.msra.mxu0 0.0
    %226 = vmatprep.subr.mxu0 0.0
    %227 = vmatpush2.msra.mxu0 0.0
    %228 = vmatprep.subr.mxu0 0.0
    %229 = vmatpush2.msra.mxu0 0.0
    %230 = vmatprep.subr.mxu0 0.0
    %231 = vmatpush2.msra.mxu0 0.0
    %232 = vmatprep.subr.mxu0 0.0
    %233 = vmatpush2.msra.mxu0 0.0
    %234 = vmatprep.subr.mxu0 0.0
    %235 = vmatpush2.msra.mxu0 0.0
    %236 = vmatprep.subr.mxu0 0.0
    %237 = vmatpush2.msra.mxu0 0.0
    %238 = vmatprep.subr.mxu0 0.0
    %239 = vmatpush2.msra.mxu0 0.0
    %240 = vmatprep.subr.mxu0 0.0
    %241 = vmatpush2.msra.mxu0 0.0
    %242 = vmatprep.subr.mxu0 0.0
    %243 = vmatpush2.msra.mxu0 0.0
    %244 = vmatprep.subr.mxu0 0.0
    %245 = vmatpush2.msra.mxu0 0.0
    %246 = vmatprep.subr.mxu0 0.0
    %247 = vmatpush2.msra.mxu0 0.0
    %248 = vmatprep.subr.mxu0 0.0
    %249 = vmatpush2.msra.mxu0 0.0
    %250 = vmatprep.mubr.f32.mxu0 0.0
    %251 = vmatmul.mubr.f32.gmra.mxu0 %v162
    %v252 = vpop.f32.mrf.mxu0
    %v253 = vadd.f32 %v184, %v252
    %v254 = vpop.f32.mrf.mxu0
    %255 = vdwg.mxu0
    %v256 = vmax.f32 %v253, 0.0
    %v257 = vld [vmem:[#allocation7] sm:$0xff]
    %v258 = vld [vmem:[#allocation7 + $0x8] sm:$0xff]
    %v259 = vld [vmem:[#allocation7 + $0x10] sm:$0xff]
    %v260 = vld [vmem:[#allocation7 + $0x18] sm:$0xff]
    %v261 = vld [vmem:[#allocation7 + $0x20] sm:$0xff]
    %v262 = vld [vmem:[#allocation7 + $0x28] sm:$0xff]
    %v263 = vld [vmem:[#allocation7 + $0x30] sm:$0xff]
    %v264 = vld [vmem:[#allocation7 + $0x38] sm:$0xff]
    %v265 = vld [vmem:[#allocation7 + $0x40] sm:$0xff]
    %v266 = vld [vmem:[#allocation7 + $0x48] sm:$0xff]
    %v267 = vld [vmem:[#allocation7 + $0x50] sm:$0xff]
    %v268 = vld [vmem:[#allocation7 + $0x58] sm:$0xff]
    %v269 = vld [vmem:[#allocation7 + $0x60] sm:$0xff]
    %v270 = vld [vmem:[#allocation7 + $0x68] sm:$0xff]
    %v271 = vld [vmem:[#allocation7 + $0x70] sm:$0xff]
    %v272 = vld [vmem:[#allocation7 + $0x78] sm:$0xff]
    %v273 = vld [vmem:[%s6] sm:$0x1]
    %v275 = vlaneseq
    %v276 = vshrl.u32 %v275, 7
    %v277 = vsub.s32 0, %v276
    %v278 = vrot.slane %v273, %v277
    %280 = vmatprep.subr.mxu0 0.0
    %281 = vmatpush1.msra.mxu0 %v272
    %282 = vmatprep.subr.mxu0 0.0
    %283 = vmatpush1.msra.mxu0 %v271
    %284 = vmatprep.subr.mxu0 0.0
    %285 = vmatpush1.msra.mxu0 %v270
    %286 = vmatprep.subr.mxu0 0.0
    %287 = vmatpush1.msra.mxu0 %v269
    %288 = vmatprep.subr.mxu0 0.0
    %289 = vmatpush1.msra.mxu0 %v268
    %290 = vmatprep.subr.mxu0 0.0
    %291 = vmatpush1.msra.mxu0 %v267
    %292 = vmatprep.subr.mxu0 0.0
    %293 = vmatpush1.msra.mxu0 %v266
    %294 = vmatprep.subr.mxu0 0.0
    %295 = vmatpush1.msra.mxu0 %v265
    %296 = vmatprep.subr.mxu0 0.0
    %297 = vmatpush1.msra.mxu0 %v264
    %298 = vmatprep.subr.mxu0 0.0
    %299 = vmatpush1.msra.mxu0 %v263
    %300 = vmatprep.subr.mxu0 0.0
    %301 = vmatpush1.msra.mxu0 %v262
    %302 = vmatprep.subr.mxu0 0.0
    %303 = vmatpush1.msra.mxu0 %v261
    %304 = vmatprep.subr.mxu0 0.0
    %305 = vmatpush1.msra.mxu0 %v260
    %306 = vmatprep.subr.mxu0 0.0
    %307 = vmatpush1.msra.mxu0 %v259
    %308 = vmatprep.subr.mxu0 0.0
    %309 = vmatpush1.msra.mxu0 %v258
    %310 = vmatprep.subr.mxu0 0.0
    %311 = vmatpush1.msra.mxu0 %v257
    %312 = vmatprep.subr.mxu0 0.0
    %313 = vmatpush2.msra.mxu0 0.0
    %314 = vmatprep.subr.mxu0 0.0
    %315 = vmatpush2.msra.mxu0 0.0
    %316 = vmatprep.subr.mxu0 0.0
    %317 = vmatpush2.msra.mxu0 0.0
    %318 = vmatprep.subr.mxu0 0.0
    %319 = vmatpush2.msra.mxu0 0.0
    %320 = vmatprep.subr.mxu0 0.0
    %321 = vmatpush2.msra.mxu0 0.0
    %322 = vmatprep.subr.mxu0 0.0
    %323 = vmatpush2.msra.mxu0 0.0
    %324 = vmatprep.subr.mxu0 0.0
    %325 = vmatpush2.msra.mxu0 0.0
    %326 = vmatprep.subr.mxu0 0.0
    %327 = vmatpush2.msra.mxu0 0.0
    %328 = vmatprep.subr.mxu0 0.0
    %329 = vmatpush2.msra.mxu0 0.0
    %330 = vmatprep.subr.mxu0 0.0
    %331 = vmatpush2.msra.mxu0 0.0
    %332 = vmatprep.subr.mxu0 0.0
    %333 = vmatpush2.msra.mxu0 0.0
    %334 = vmatprep.subr.mxu0 0.0
    %335 = vmatpush2.msra.mxu0 0.0
    %336 = vmatprep.subr.mxu0 0.0
    %337 = vmatpush2.msra.mxu0 0.0
    %338 = vmatprep.subr.mxu0 0.0
    %339 = vmatpush2.msra.mxu0 0.0
    %340 = vmatprep.subr.mxu0 0.0
    %341 = vmatpush2.msra.mxu0 0.0
    %342 = vmatprep.subr.mxu0 0.0
    %343 = vmatpush2.msra.mxu0 0.0
    %344 = vmatprep.mubr.f32.mxu0 0.0
    %345 = vmatmul.mubr.f32.gmra.mxu0 %v256
    %v346 = vpop.f32.mrf.mxu0
    %v347 = vadd.f32 %v278, %v346
    %v348 = vpop.f32.mrf.mxu0
    %349 = vdwg.mxu0
    %350 = vst [vmem:[#allocation8] sm:$0xff] %v347
    // Predicated region
    $region42: #{_fused_forward.1} parent=1 // pred_check
      _
    $region43: #{_fused_forward.1} parent=1 // pred_check_branch
      %352 = sbr.rel (0) target = $region45
    $region44: #{_fused_forward.1} parent=1 // pred_region
      %s354 = ssub.s32 128, 128
      %355 = vsyncadd [#allocation4], %s354
      %s357 = sshll.u32 [#allocation8], 4
      %s358 = int_to_ptr.vmem [resolvable:$true] %s357
      %360 = dma.vmem_to_hbm [thread:$0]  %s358, 128, %s7, [#allocation4]
    $region45: #{_fused_forward.1} parent=1 // pred_fallthru
      _
    // Predicated region
    $region46: #{_fused_forward.1} parent=1 // pred_check
      _
    $region47: #{_fused_forward.1} parent=1 // pred_check_branch
      %362 = sbr.rel (0) target = $region49
    $region48: #{_fused_forward.1} parent=1 // pred_region
      %363 = dma.done [#allocation4], 128
    $region49: #{_fused_forward.1} parent=1 // pred_fallthru
      _
    %364 = vsyncpa [#allocation3], 1
    %365 = vsyncpa [#allocation6], 1
    %366 = vsyncpa [#allocation4], 1

// kernel: _tiled_forward.3
$region0: #{_tiled_forward.3}
  #allocation0 [shape = 'u32[]', space=smem, size = 0x4, offset = 0x4, fixed_abs, tag = 'smem constant byte address 0x4 - core index']
  #allocation1 [shape = 'u32[144,128]{1,0:T(1,128)}', space=vmem, size = 0x12000, scoped, tag = 'internal scratch']
  #allocation2 [shape = 'f32[8,128]{1,0:T(8,128)}', space=vmem, size = 0x1000, scoped, tag = 'scratch operand']
  %s0 = inlined_call_operand.vmem [shape: f32[8,128], index: 0, kind: input, shape index: {}]
  %s1 = inlined_call_operand.hbm [shape: f32[128,128], index: 1, kind: input, shape index: {}]
  %s2 = inlined_call_operand.hbm [shape: f32[1,128], index: 2, kind: input, shape index: {}]
  %s3 = inlined_call_operand.vmem [shape: f32[8,128], index: 3, kind: output, shape index: {}]
  %s4 = sld [smem:[#allocation0]]
  $region38: #{_tiled_forward.3} parent=0
    _
  %s6 = ssub.s32 1, %s4
  %s7 = scalar_select 0, %s6, %s4
  $region1: #{_tiled_forward.3} parent=0
    #allocation3 [shape = 'u8[65536]{0}', space=vmem, size = 0x10000, scoped, tag = 'input window, operand 1, single buffered']
    #allocation4 [shape = 's32[1]{0}', space=sflag, size = 0x4, scoped, tag = 'scoped memory for _tiled_forward.3']
    #allocation5 [shape = 'u8[512]{0}', space=vmem, size = 0x400, scoped, tag = 'input window, operand 2, single buffered']
    #allocation6 [shape = 's32[1]{0}', space=sflag, size = 0x4, scoped, tag = 'scoped memory for _tiled_forward.3']
    %8 = vsyncpa [#allocation4], 0
    %9 = vsyncpa [#allocation6], 0
    // Predicated region
    $region2: #{_tiled_forward.3} parent=1 // pred_check
      _
    $region3: #{_tiled_forward.3} parent=1 // pred_check_branch
      %11 = sbr.rel (0) target = $region5
    $region4: #{_tiled_forward.3} parent=1 // pred_region
      _
    $region5: #{_tiled_forward.3} parent=1 // pred_fallthru
      _
    // Predicated region
    $region6: #{_tiled_forward.3} parent=1 // pred_check
      _
    $region7: #{_tiled_forward.3} parent=1 // pred_check_branch
      %13 = sbr.rel (0) target = $region9
    $region8: #{_tiled_forward.3} parent=1 // pred_region
      %s15 = ssub.s32 2048, 2048
      %16 = vsyncadd [#allocation4], %s15
      %s17 = sshll.u32 [#allocation3], 4
      %s18 = int_to_ptr.vmem [resolvable:$true] %s17
      %23 = dma.hbm_to_vmem [thread:$0]  %s1, 2048, %s18, [#allocation4], 128, 128, 8
    $region9: #{_tiled_forward.3} parent=1 // pred_fallthru
      _
    // Predicated region
    $region10: #{_tiled_forward.3} parent=1 // pred_check
      _
    $region11: #{_tiled_forward.3} parent=1 // pred_check_branch
      %25 = sbr.rel (0) target = $region13
    $region12: #{_tiled_forward.3} parent=1 // pred_region
      %s27 = ssub.s32 16, 16
      %28 = vsyncadd [#allocation6], %s27
      %s30 = sshll.u32 [#allocation5], 4
      %s31 = int_to_ptr.vmem [resolvable:$true] %s30
      %33 = dma.hbm_to_vmem [thread:$0]  %s2, 16, %s31, [#allocation6]
    $region13: #{_tiled_forward.3} parent=1 // pred_fallthru
      _
    // Predicated region
    $region14: #{_tiled_forward.3} parent=1 // pred_check
      _
    $region15: #{_tiled_forward.3} parent=1 // pred_check_branch
      %35 = sbr.rel (0) target = $region17
    $region16: #{_tiled_forward.3} parent=1 // pred_region
      %36 = dma.done [#allocation4], 2048
    $region17: #{_tiled_forward.3} parent=1 // pred_fallthru
      _
    // Predicated region
    $region18: #{_tiled_forward.3} parent=1 // pred_check
      _
    $region19: #{_tiled_forward.3} parent=1 // pred_check_branch
      %38 = sbr.rel (0) target = $region21
    $region20: #{_tiled_forward.3} parent=1 // pred_region
      %39 = dma.done [#allocation6], 16
    $region21: #{_tiled_forward.3} parent=1 // pred_fallthru
      _
    %p40 = scmp.eq.s32.totalorder 0, 0
    // Predicated region
    $region22: #{_tiled_forward.3} parent=1 // pred_check
      %p41 = pneg %p40
    $region23: #{_tiled_forward.3} parent=1 // pred_check_branch
      %43 = sbr.rel (%p41) target = $region25
    $region24: #{_tiled_forward.3} parent=1 // pred_region
      %44 = vst [vmem:[#allocation2] sm:$0xff] 0.0
    $region25: #{_tiled_forward.3} parent=1 // pred_fallthru
      _
    %v45 = vld [vmem:[#allocation2] sm:$0xff]
    %v46 = vld [vmem:[%s0] sm:$0xff]
    %v47 = vld [vmem:[#allocation3] sm:$0xff]
    %v48 = vld [vmem:[#allocation3 + $0x8] sm:$0xff]
    %v49 = vld [vmem:[#allocation3 + $0x10] sm:$0xff]
    %v50 = vld [vmem:[#allocation3 + $0x18] sm:$0xff]
    %v51 = vld [vmem:[#allocation3 + $0x20] sm:$0xff]
    %v52 = vld [vmem:[#allocation3 + $0x28] sm:$0xff]
    %v53 = vld [vmem:[#allocation3 + $0x30] sm:$0xff]
    %v54 = vld [vmem:[#allocation3 + $0x38] sm:$0xff]
    %v55 = vld [vmem:[#allocation3 + $0x40] sm:$0xff]
    %v56 = vld [vmem:[#allocation3 + $0x48] sm:$0xff]
    %v57 = vld [vmem:[#allocation3 + $0x50] sm:$0xff]
    %v58 = vld [vmem:[#allocation3 + $0x58] sm:$0xff]
    %v59 = vld [vmem:[#allocation3 + $0x60] sm:$0xff]
    %v60 = vld [vmem:[#allocation3 + $0x68] sm:$0xff]
    %v61 = vld [vmem:[#allocation3 + $0x70] sm:$0xff]
    %v62 = vld [vmem:[#allocation3 + $0x78] sm:$0xff]
    %63 = vmatprep.subr.mxu0 0.0
    %64 = vmatpush1.msra.mxu0 %v62
    %65 = vmatprep.subr.mxu0 0.0
    %66 = vmatpush1.msra.mxu0 %v61
    %67 = vmatprep.subr.mxu0 0.0
    %68 = vmatpush1.msra.mxu0 %v60
    %69 = vmatprep.subr.mxu0 0.0
    %70 = vmatpush1.msra.mxu0 %v59
    %71 = vmatprep.subr.mxu0 0.0
    %72 = vmatpush1.msra.mxu0 %v58
    %73 = vmatprep.subr.mxu0 0.0
    %74 = vmatpush1.msra.mxu0 %v57
    %75 = vmatprep.subr.mxu0 0.0
    %76 = vmatpush1.msra.mxu0 %v56
    %77 = vmatprep.subr.mxu0 0.0
    %78 = vmatpush1.msra.mxu0 %v55
    %79 = vmatprep.subr.mxu0 0.0
    %80 = vmatpush1.msra.mxu0 %v54
    %81 = vmatprep.subr.mxu0 0.0
    %82 = vmatpush1.msra.mxu0 %v53
    %83 = vmatprep.subr.mxu0 0.0
    %84 = vmatpush1.msra.mxu0 %v52
    %85 = vmatprep.subr.mxu0 0.0
    %86 = vmatpush1.msra.mxu0 %v51
    %87 = vmatprep.subr.mxu0 0.0
    %88 = vmatpush1.msra.mxu0 %v50
    %89 = vmatprep.subr.mxu0 0.0
    %90 = vmatpush1.msra.mxu0 %v49
    %91 = vmatprep.subr.mxu0 0.0
    %92 = vmatpush1.msra.mxu0 %v48
    %93 = vmatprep.subr.mxu0 0.0
    %94 = vmatpush1.msra.mxu0 %v47
    %95 = vmatprep.subr.mxu0 0.0
    %96 = vmatpush2.msra.mxu0 0.0
    %97 = vmatprep.subr.mxu0 0.0
    %98 = vmatpush2.msra.mxu0 0.0
    %99 = vmatprep.subr.mxu0 0.0
    %100 = vmatpush2.msra.mxu0 0.0
    %101 = vmatprep.subr.mxu0 0.0
    %102 = vmatpush2.msra.mxu0 0.0
    %103 = vmatprep.subr.mxu0 0.0
    %104 = vmatpush2.msra.mxu0 0.0
    %105 = vmatprep.subr.mxu0 0.0
    %106 = vmatpush2.msra.mxu0 0.0
    %107 = vmatprep.subr.mxu0 0.0
    %108 = vmatpush2.msra.mxu0 0.0
    %109 = vmatprep.subr.mxu0 0.0
    %110 = vmatpush2.msra.mxu0 0.0
    %111 = vmatprep.subr.mxu0 0.0
    %112 = vmatpush2.msra.mxu0 0.0
    %113 = vmatprep.subr.mxu0 0.0
    %114 = vmatpush2.msra.mxu0 0.0
    %115 = vmatprep.subr.mxu0 0.0
    %116 = vmatpush2.msra.mxu0 0.0
    %117 = vmatprep.subr.mxu0 0.0
    %118 = vmatpush2.msra.mxu0 0.0
    %119 = vmatprep.subr.mxu0 0.0
    %120 = vmatpush2.msra.mxu0 0.0
    %121 = vmatprep.subr.mxu0 0.0
    %122 = vmatpush2.msra.mxu0 0.0
    %123 = vmatprep.subr.mxu0 0.0
    %124 = vmatpush2.msra.mxu0 0.0
    %125 = vmatprep.subr.mxu0 0.0
    %126 = vmatpush2.msra.mxu0 0.0
    %127 = vmatprep.mubr.f32.mxu0 0.0
    %128 = vmatmul.mubr.f32.gmra.mxu0 %v46
    %v129 = vpop.f32.mrf.mxu0
    %v130 = vadd.f32 0.0, %v129
    %v131 = vpop.f32.mrf.mxu0
    %132 = vdwg.mxu0
    %v133 = vadd.f32 %v45, %v130
    %134 = vst [vmem:[#allocation2] sm:$0xff] %v133
    // Predicated region
    $region26: #{_tiled_forward.3} parent=1 // pred_check
      %p135 = pneg %p40
    $region27: #{_tiled_forward.3} parent=1 // pred_check_branch
      %137 = sbr.rel (%p135) target = $region29
    $region28: #{_tiled_forward.3} parent=1 // pred_region
      %v138 = vld [vmem:[#allocation2] sm:$0xff]
      %v139 = vld [vmem:[#allocation5] sm:$0x1]
      %v141 = vlaneseq
      %v142 = vshrl.u32 %v141, 7
      %v143 = vsub.s32 0, %v142
      %v144 = vrot.slane %v139, %v143
      %v146 = vadd.f32 %v138, %v144
      %v147 = vmax.f32 %v146, 0.0
      %148 = vst [vmem:[%s3] sm:$0xff] %v147
    $region29: #{_tiled_forward.3} parent=1 // pred_fallthru
      _
    // Predicated region
    $region30: #{_tiled_forward.3} parent=1 // pred_check
      _
    $region31: #{_tiled_forward.3} parent=1 // pred_check_branch
      %150 = sbr.rel (0) target = $region33
    $region32: #{_tiled_forward.3} parent=1 // pred_region
      _
    $region33: #{_tiled_forward.3} parent=1 // pred_fallthru
      _
    // Predicated region
    $region34: #{_tiled_forward.3} parent=1 // pred_check
      _
    $region35: #{_tiled_forward.3} parent=1 // pred_check_branch
      %152 = sbr.rel (0) target = $region37
    $region36: #{_tiled_forward.3} parent=1 // pred_region
      _
    $region37: #{_tiled_forward.3} parent=1 // pred_fallthru
      _
    %153 = vsyncpa [#allocation4], 1
    %154 = vsyncpa [#allocation6], 1

// kernel: _tiled_forward.4
$region0: #{_tiled_forward.4}
  #allocation0 [shape = 'u32[]', space=smem, size = 0x4, offset = 0x4, fixed_abs, tag = 'smem constant byte address 0x4 - core index']
  #allocation1 [shape = 'u32[144,128]{1,0:T(1,128)}', space=vmem, size = 0x12000, scoped, tag = 'internal scratch']
  #allocation2 [shape = 'f32[8,128]{1,0:T(8,128)}', space=vmem, size = 0x1000, scoped, tag = 'scratch operand']
  %s0 = inlined_call_operand.vmem [shape: f32[8,128], index: 0, kind: input, shape index: {}]
  %s1 = inlined_call_operand.vmem [shape: f32[128,128], index: 1, kind: input, shape index: {}]
  %s2 = inlined_call_operand.vmem [shape: f32[1,128], index: 2, kind: input, shape index: {}]
  %s3 = inlined_call_operand.vmem [shape: f32[8,128], index: 3, kind: output, shape index: {}]
  %s4 = sld [smem:[#allocation0]]
  $region30: #{_tiled_forward.4} parent=0
    _
  %s6 = ssub.s32 1, %s4
  %s7 = scalar_select 0, %s6, %s4
  // Predicated region
  $region2: #{_tiled_forward.4} parent=0 // pred_check
    _
  $region3: #{_tiled_forward.4} parent=0 // pred_check_branch
    %9 = sbr.rel (0) target = $region5
  $region4: #{_tiled_forward.4} parent=0 // pred_region
    _
  $region5: #{_tiled_forward.4} parent=0 // pred_fallthru
    _
  // Predicated region
  $region6: #{_tiled_forward.4} parent=0 // pred_check
    _
  $region7: #{_tiled_forward.4} parent=0 // pred_check_branch
    %11 = sbr.rel (0) target = $region9
  $region8: #{_tiled_forward.4} parent=0 // pred_region
    _
  $region9: #{_tiled_forward.4} parent=0 // pred_fallthru
    _
  // Predicated region
  $region10: #{_tiled_forward.4} parent=0 // pred_check
    _
  $region11: #{_tiled_forward.4} parent=0 // pred_check_branch
    %13 = sbr.rel (0) target = $region13
  $region12: #{_tiled_forward.4} parent=0 // pred_region
    _
  $region13: #{_tiled_forward.4} parent=0 // pred_fallthru
    _
  %p14 = scmp.eq.s32.totalorder 0, 0
  // Predicated region
  $region14: #{_tiled_forward.4} parent=0 // pred_check
    %p15 = pneg %p14
  $region15: #{_tiled_forward.4} parent=0 // pred_check_branch
    %17 = sbr.rel (%p15) target = $region17
  $region16: #{_tiled_forward.4} parent=0 // pred_region
    %18 = vst [vmem:[#allocation2] sm:$0xff] 0.0
  $region17: #{_tiled_forward.4} parent=0 // pred_fallthru
    _
  %v19 = vld [vmem:[#allocation2] sm:$0xff]
  %v20 = vld [vmem:[%s0] sm:$0xff]
  %v21 = vld [vmem:[%s1] sm:$0xff]
  %v22 = vld [vmem:[%s1 + $0x8] sm:$0xff]
  %v23 = vld [vmem:[%s1 + $0x10] sm:$0xff]
  %v24 = vld [vmem:[%s1 + $0x18] sm:$0xff]
  %v25 = vld [vmem:[%s1 + $0x20] sm:$0xff]
  %v26 = vld [vmem:[%s1 + $0x28] sm:$0xff]
  %v27 = vld [vmem:[%s1 + $0x30] sm:$0xff]
  %v28 = vld [vmem:[%s1 + $0x38] sm:$0xff]
  %v29 = vld [vmem:[%s1 + $0x40] sm:$0xff]
  %v30 = vld [vmem:[%s1 + $0x48] sm:$0xff]
  %v31 = vld [vmem:[%s1 + $0x50] sm:$0xff]
  %v32 = vld [vmem:[%s1 + $0x58] sm:$0xff]
  %v33 = vld [vmem:[%s1 + $0x60] sm:$0xff]
  %v34 = vld [vmem:[%s1 + $0x68] sm:$0xff]
  %v35 = vld [vmem:[%s1 + $0x70] sm:$0xff]
  %v36 = vld [vmem:[%s1 + $0x78] sm:$0xff]
  %37 = vmatprep.subr.mxu0 0.0
  %38 = vmatpush1.msra.mxu0 %v36
  %39 = vmatprep.subr.mxu0 0.0
  %40 = vmatpush1.msra.mxu0 %v35
  %41 = vmatprep.subr.mxu0 0.0
  %42 = vmatpush1.msra.mxu0 %v34
  %43 = vmatprep.subr.mxu0 0.0
  %44 = vmatpush1.msra.mxu0 %v33
  %45 = vmatprep.subr.mxu0 0.0
  %46 = vmatpush1.msra.mxu0 %v32
  %47 = vmatprep.subr.mxu0 0.0
  %48 = vmatpush1.msra.mxu0 %v31
  %49 = vmatprep.subr.mxu0 0.0
  %50 = vmatpush1.msra.mxu0 %v30
  %51 = vmatprep.subr.mxu0 0.0
  %52 = vmatpush1.msra.mxu0 %v29
  %53 = vmatprep.subr.mxu0 0.0
  %54 = vmatpush1.msra.mxu0 %v28
  %55 = vmatprep.subr.mxu0 0.0
  %56 = vmatpush1.msra.mxu0 %v27
  %57 = vmatprep.subr.mxu0 0.0
  %58 = vmatpush1.msra.mxu0 %v26
  %59 = vmatprep.subr.mxu0 0.0
  %60 = vmatpush1.msra.mxu0 %v25
  %61 = vmatprep.subr.mxu0 0.0
  %62 = vmatpush1.msra.mxu0 %v24
  %63 = vmatprep.subr.mxu0 0.0
  %64 = vmatpush1.msra.mxu0 %v23
  %65 = vmatprep.subr.mxu0 0.0
  %66 = vmatpush1.msra.mxu0 %v22
  %67 = vmatprep.subr.mxu0 0.0
  %68 = vmatpush1.msra.mxu0 %v21
  %69 = vmatprep.subr.mxu0 0.0
  %70 = vmatpush2.msra.mxu0 0.0
  %71 = vmatprep.subr.mxu0 0.0
  %72 = vmatpush2.msra.mxu0 0.0
  %73 = vmatprep.subr.mxu0 0.0
  %74 = vmatpush2.msra.mxu0 0.0
  %75 = vmatprep.subr.mxu0 0.0
  %76 = vmatpush2.msra.mxu0 0.0
  %77 = vmatprep.subr.mxu0 0.0
  %78 = vmatpush2.msra.mxu0 0.0
  %79 = vmatprep.subr.mxu0 0.0
  %80 = vmatpush2.msra.mxu0 0.0
  %81 = vmatprep.subr.mxu0 0.0
  %82 = vmatpush2.msra.mxu0 0.0
  %83 = vmatprep.subr.mxu0 0.0
  %84 = vmatpush2.msra.mxu0 0.0
  %85 = vmatprep.subr.mxu0 0.0
  %86 = vmatpush2.msra.mxu0 0.0
  %87 = vmatprep.subr.mxu0 0.0
  %88 = vmatpush2.msra.mxu0 0.0
  %89 = vmatprep.subr.mxu0 0.0
  %90 = vmatpush2.msra.mxu0 0.0
  %91 = vmatprep.subr.mxu0 0.0
  %92 = vmatpush2.msra.mxu0 0.0
  %93 = vmatprep.subr.mxu0 0.0
  %94 = vmatpush2.msra.mxu0 0.0
  %95 = vmatprep.subr.mxu0 0.0
  %96 = vmatpush2.msra.mxu0 0.0
  %97 = vmatprep.subr.mxu0 0.0
  %98 = vmatpush2.msra.mxu0 0.0
  %99 = vmatprep.subr.mxu0 0.0
  %100 = vmatpush2.msra.mxu0 0.0
  %101 = vmatprep.mubr.f32.mxu0 0.0
  %102 = vmatmul.mubr.f32.gmra.mxu0 %v20
  %v103 = vpop.f32.mrf.mxu0
  %v104 = vadd.f32 0.0, %v103
  %v105 = vpop.f32.mrf.mxu0
  %106 = vdwg.mxu0
  %v107 = vadd.f32 %v19, %v104
  %108 = vst [vmem:[#allocation2] sm:$0xff] %v107
  // Predicated region
  $region18: #{_tiled_forward.4} parent=0 // pred_check
    %p109 = pneg %p14
  $region19: #{_tiled_forward.4} parent=0 // pred_check_branch
    %111 = sbr.rel (%p109) target = $region21
  $region20: #{_tiled_forward.4} parent=0 // pred_region
    %v112 = vld [vmem:[#allocation2] sm:$0xff]
    %v113 = vld [vmem:[%s2] sm:$0x1]
    %v115 = vlaneseq
    %v116 = vshrl.u32 %v115, 7
    %v117 = vsub.s32 0, %v116
    %v118 = vrot.slane %v113, %v117
    %v120 = vadd.f32 %v112, %v118
    %v121 = vmax.f32 %v120, 0.0
    %122 = vst [vmem:[%s3] sm:$0xff] %v121
  $region21: #{_tiled_forward.4} parent=0 // pred_fallthru
    _
  // Predicated region
  $region22: #{_tiled_forward.4} parent=0 // pred_check
    _
  $region23: #{_tiled_forward.4} parent=0 // pred_check_branch
    %124 = sbr.rel (0) target = $region25
  $region24: #{_tiled_forward.4} parent=0 // pred_region
    _
  $region25: #{_tiled_forward.4} parent=0 // pred_fallthru
    _
  // Predicated region
  $region26: #{_tiled_forward.4} parent=0 // pred_check
    _
  $region27: #{_tiled_forward.4} parent=0 // pred_check_branch
    %126 = sbr.rel (0) target = $region29
  $region28: #{_tiled_forward.4} parent=0 // pred_region
    _
  $region29: #{_tiled_forward.4} parent=0 // pred_fallthru
    _

// kernel: _tiled_forward.5
$region0: #{_tiled_forward.5}
  #allocation0 [shape = 'u32[]', space=smem, size = 0x4, offset = 0x4, fixed_abs, tag = 'smem constant byte address 0x4 - core index']
  #allocation1 [shape = 'u32[144,128]{1,0:T(1,128)}', space=vmem, size = 0x12000, scoped, tag = 'internal scratch']
  #allocation2 [shape = 'f32[8,128]{1,0:T(8,128)}', space=vmem, size = 0x1000, scoped, tag = 'scratch operand']
  %s0 = inlined_call_operand.vmem [shape: f32[8,128], index: 0, kind: input, shape index: {}]
  %s1 = inlined_call_operand.vmem [shape: f32[128,128], index: 1, kind: input, shape index: {}]
  %s2 = inlined_call_operand.vmem [shape: f32[1,128], index: 2, kind: input, shape index: {}]
  %s3 = inlined_call_operand.hbm [shape: f32[8,128], index: 3, kind: output, shape index: {}]
  %s4 = sld [smem:[#allocation0]]
  $region30: #{_tiled_forward.5} parent=0
    _
  %s6 = ssub.s32 1, %s4
  %s7 = scalar_select 0, %s6, %s4
  $region1: #{_tiled_forward.5} parent=0
    #allocation3 [shape = 'u8[4096]{0}', space=vmem, size = 0x1000, scoped, tag = 'output window, operand 0, single buffered']
    #allocation4 [shape = 's32[1]{0}', space=sflag, size = 0x4, scoped, tag = 'scoped memory for _tiled_forward.5']
    %8 = vsyncpa [#allocation4], 0
    // Predicated region
    $region2: #{_tiled_forward.5} parent=1 // pred_check
      _
    $region3: #{_tiled_forward.5} parent=1 // pred_check_branch
      %10 = sbr.rel (0) target = $region5
    $region4: #{_tiled_forward.5} parent=1 // pred_region
      _
    $region5: #{_tiled_forward.5} parent=1 // pred_fallthru
      _
    // Predicated region
    $region6: #{_tiled_forward.5} parent=1 // pred_check
      _
    $region7: #{_tiled_forward.5} parent=1 // pred_check_branch
      %12 = sbr.rel (0) target = $region9
    $region8: #{_tiled_forward.5} parent=1 // pred_region
      _
    $region9: #{_tiled_forward.5} parent=1 // pred_fallthru
      _
    // Predicated region
    $region10: #{_tiled_forward.5} parent=1 // pred_check
      _
    $region11: #{_tiled_forward.5} parent=1 // pred_check_branch
      %14 = sbr.rel (0) target = $region13
    $region12: #{_tiled_forward.5} parent=1 // pred_region
      _
    $region13: #{_tiled_forward.5} parent=1 // pred_fallthru
      _
    %p15 = scmp.eq.s32.totalorder 0, 0
    // Predicated region
    $region14: #{_tiled_forward.5} parent=1 // pred_check
      %p16 = pneg %p15
    $region15: #{_tiled_forward.5} parent=1 // pred_check_branch
      %18 = sbr.rel (%p16) target = $region17
    $region16: #{_tiled_forward.5} parent=1 // pred_region
      %19 = vst [vmem:[#allocation2] sm:$0xff] 0.0
    $region17: #{_tiled_forward.5} parent=1 // pred_fallthru
      _
    %v20 = vld [vmem:[#allocation2] sm:$0xff]
    %v21 = vld [vmem:[%s0] sm:$0xff]
    %v22 = vld [vmem:[%s1] sm:$0xff]
    %v23 = vld [vmem:[%s1 + $0x8] sm:$0xff]
    %v24 = vld [vmem:[%s1 + $0x10] sm:$0xff]
    %v25 = vld [vmem:[%s1 + $0x18] sm:$0xff]
    %v26 = vld [vmem:[%s1 + $0x20] sm:$0xff]
    %v27 = vld [vmem:[%s1 + $0x28] sm:$0xff]
    %v28 = vld [vmem:[%s1 + $0x30] sm:$0xff]
    %v29 = vld [vmem:[%s1 + $0x38] sm:$0xff]
    %v30 = vld [vmem:[%s1 + $0x40] sm:$0xff]
    %v31 = vld [vmem:[%s1 + $0x48] sm:$0xff]
    %v32 = vld [vmem:[%s1 + $0x50] sm:$0xff]
    %v33 = vld [vmem:[%s1 + $0x58] sm:$0xff]
    %v34 = vld [vmem:[%s1 + $0x60] sm:$0xff]
    %v35 = vld [vmem:[%s1 + $0x68] sm:$0xff]
    %v36 = vld [vmem:[%s1 + $0x70] sm:$0xff]
    %v37 = vld [vmem:[%s1 + $0x78] sm:$0xff]
    %38 = vmatprep.subr.mxu0 0.0
    %39 = vmatpush1.msra.mxu0 %v37
    %40 = vmatprep.subr.mxu0 0.0
    %41 = vmatpush1.msra.mxu0 %v36
    %42 = vmatprep.subr.mxu0 0.0
    %43 = vmatpush1.msra.mxu0 %v35
    %44 = vmatprep.subr.mxu0 0.0
    %45 = vmatpush1.msra.mxu0 %v34
    %46 = vmatprep.subr.mxu0 0.0
    %47 = vmatpush1.msra.mxu0 %v33
    %48 = vmatprep.subr.mxu0 0.0
    %49 = vmatpush1.msra.mxu0 %v32
    %50 = vmatprep.subr.mxu0 0.0
    %51 = vmatpush1.msra.mxu0 %v31
    %52 = vmatprep.subr.mxu0 0.0
    %53 = vmatpush1.msra.mxu0 %v30
    %54 = vmatprep.subr.mxu0 0.0
    %55 = vmatpush1.msra.mxu0 %v29
    %56 = vmatprep.subr.mxu0 0.0
    %57 = vmatpush1.msra.mxu0 %v28
    %58 = vmatprep.subr.mxu0 0.0
    %59 = vmatpush1.msra.mxu0 %v27
    %60 = vmatprep.subr.mxu0 0.0
    %61 = vmatpush1.msra.mxu0 %v26
    %62 = vmatprep.subr.mxu0 0.0
    %63 = vmatpush1.msra.mxu0 %v25
    %64 = vmatprep.subr.mxu0 0.0
    %65 = vmatpush1.msra.mxu0 %v24
    %66 = vmatprep.subr.mxu0 0.0
    %67 = vmatpush1.msra.mxu0 %v23
    %68 = vmatprep.subr.mxu0 0.0
    %69 = vmatpush1.msra.mxu0 %v22
    %70 = vmatprep.subr.mxu0 0.0
    %71 = vmatpush2.msra.mxu0 0.0
    %72 = vmatprep.subr.mxu0 0.0
    %73 = vmatpush2.msra.mxu0 0.0
    %74 = vmatprep.subr.mxu0 0.0
    %75 = vmatpush2.msra.mxu0 0.0
    %76 = vmatprep.subr.mxu0 0.0
    %77 = vmatpush2.msra.mxu0 0.0
    %78 = vmatprep.subr.mxu0 0.0
    %79 = vmatpush2.msra.mxu0 0.0
    %80 = vmatprep.subr.mxu0 0.0
    %81 = vmatpush2.msra.mxu0 0.0
    %82 = vmatprep.subr.mxu0 0.0
    %83 = vmatpush2.msra.mxu0 0.0
    %84 = vmatprep.subr.mxu0 0.0
    %85 = vmatpush2.msra.mxu0 0.0
    %86 = vmatprep.subr.mxu0 0.0
    %87 = vmatpush2.msra.mxu0 0.0
    %88 = vmatprep.subr.mxu0 0.0
    %89 = vmatpush2.msra.mxu0 0.0
    %90 = vmatprep.subr.mxu0 0.0
    %91 = vmatpush2.msra.mxu0 0.0
    %92 = vmatprep.subr.mxu0 0.0
    %93 = vmatpush2.msra.mxu0 0.0
    %94 = vmatprep.subr.mxu0 0.0
    %95 = vmatpush2.msra.mxu0 0.0
    %96 = vmatprep.subr.mxu0 0.0
    %97 = vmatpush2.msra.mxu0 0.0
    %98 = vmatprep.subr.mxu0 0.0
    %99 = vmatpush2.msra.mxu0 0.0
    %100 = vmatprep.subr.mxu0 0.0
    %101 = vmatpush2.msra.mxu0 0.0
    %102 = vmatprep.mubr.f32.mxu0 0.0
    %103 = vmatmul.mubr.f32.gmra.mxu0 %v21
    %v104 = vpop.f32.mrf.mxu0
    %v105 = vadd.f32 0.0, %v104
    %v106 = vpop.f32.mrf.mxu0
    %107 = vdwg.mxu0
    %v108 = vadd.f32 %v20, %v105
    %109 = vst [vmem:[#allocation2] sm:$0xff] %v108
    // Predicated region
    $region18: #{_tiled_forward.5} parent=1 // pred_check
      %p110 = pneg %p15
    $region19: #{_tiled_forward.5} parent=1 // pred_check_branch
      %112 = sbr.rel (%p110) target = $region21
    $region20: #{_tiled_forward.5} parent=1 // pred_region
      %v113 = vld [vmem:[#allocation2] sm:$0xff]
      %v114 = vld [vmem:[%s2] sm:$0x1]
      %v116 = vlaneseq
      %v117 = vshrl.u32 %v116, 7
      %v118 = vsub.s32 0, %v117
      %v119 = vrot.slane %v114, %v118
      %v121 = vadd.f32 %v113, %v119
      %122 = vst [vmem:[#allocation3] sm:$0xff] %v121
    $region21: #{_tiled_forward.5} parent=1 // pred_fallthru
      _
    // Predicated region
    $region22: #{_tiled_forward.5} parent=1 // pred_check
      _
    $region23: #{_tiled_forward.5} parent=1 // pred_check_branch
      %124 = sbr.rel (0) target = $region25
    $region24: #{_tiled_forward.5} parent=1 // pred_region
      %s126 = ssub.s32 128, 128
      %127 = vsyncadd [#allocation4], %s126
      %s129 = sshll.u32 [#allocation3], 4
      %s130 = int_to_ptr.vmem [resolvable:$true] %s129
      %132 = dma.vmem_to_hbm [thread:$0]  %s130, 128, %s3, [#allocation4]
    $region25: #{_tiled_forward.5} parent=1 // pred_fallthru
      _
    // Predicated region
    $region26: #{_tiled_forward.5} parent=1 // pred_check
      _
    $region27: #{_tiled_forward.5} parent=1 // pred_check_branch
      %134 = sbr.rel (0) target = $region29
    $region28: #{_tiled_forward.5} parent=1 // pred_region
      %135 = dma.done [#allocation4], 128
    $region29: #{_tiled_forward.5} parent=1 // pred_fallthru
      _
    %136 = vsyncpa [#allocation4], 1

</llo_original>
